<compile_context>
chip_gen: v5e
topology: v5e:2x2
jax: 0.10.0
libtpu: 0.0.40
codegen_flags: <defaults>
</compile_context>

<pallas_src>
import functools
import numpy as np
import jax
import jax.numpy as jnp
from jax import lax
from jax.experimental import pallas as pl
from jax.experimental.pallas import tpu as pltpu

TIMESTEPS = 100
OBS_DIM = 9      # apply_observation writes data['traj'] into x_t[..., :9]
LANES = 128


# ----------------------------------------------------------------------------
# Schedule (make_schedule_ddpm, 'linear') -- only the buffers forward touches.
# ----------------------------------------------------------------------------
def make_schedule_ddpm_linear(timesteps: int, beta0: float, beta1: float):
    assert beta0 < beta1 < 1.0
    betas = jnp.linspace(beta0, beta1, timesteps, dtype=jnp.float32)
    alphas = 1.0 - betas
    alphas_cumprod = jnp.cumprod(alphas)
    return {
        "sqrt_alphas_cumprod": jnp.sqrt(alphas_cumprod).astype(jnp.float32),
        "sqrt_one_minus_alphas_cumprod": jnp.sqrt(1.0 - alphas_cumprod).astype(jnp.float32),
    }


# ----------------------------------------------------------------------------
# Pallas kernel: one row tile of fused q_sample + apply_observation + eps_model.
# All arrays may be "lane packed" (P logical rows per physical row); the weights
# are then block-diagonal so the math is unchanged.
# ----------------------------------------------------------------------------
def ddpm_fwd_kernel(coef_ref, x0_ref, noise_ref, traj_ref, temb_ref,
                    w1_ref, w2_ref, b2_ref, out_ref, *, d_logical, obs):
    # q_sample: x_t = sqrt_ac[ts] * x0 + sqrt(1-ac)[ts] * noise  (per-row coeffs, lanes 0/1)
    coef = coef_ref[...]                                   # (rows, 2) f32
    sac = coef[:, 0:1]
    somac = coef[:, 1:2]
    x_t = sac * x0_ref[...] + somac * noise_ref[...]       # (rows, L) f32

    # apply_observation (obser_type='traj'): blend traj into the first OBS lanes of every
    # logical row -- pure vreg lane-mask select, no VMEM scratch round-trip.
    lane = lax.broadcasted_iota(jnp.int32, (1, x_t.shape[1]), 1)
    obs_mask = (lane % d_logical) < obs                    # (1, L) bool
    x_obs = jnp.where(obs_mask, traj_ref[...], x_t).astype(jnp.bfloat16)

    # eps_model: 2-layer MLP over the feature dim + additive per-row time embedding.
    # TODO(synk): the real eps_model is an external nn.Module; this synthetic MLP stands in for it.
    h = jnp.dot(x_obs, w1_ref[...], preferred_element_type=jnp.float32)   # (rows, P*H) f32
    h = h + temb_ref[...]                                  # b1 folded into temb by the wrapper
    h = h * jax.nn.sigmoid(h)                              # SiLU (EUP)
    out = jnp.dot(h.astype(jnp.bfloat16), w2_ref[...],
                  preferred_element_type=jnp.float32)      # (rows, L) f32
    out_ref[...] = (out + b2_ref[...]).astype(out_ref.dtype)


# ----------------------------------------------------------------------------
# Wrapper helpers
# ----------------------------------------------------------------------------
def _num_tensorcores_per_chip():
    """Best-effort: dual-TC chips (v7x-style / v4 megacore) benefit from >=2 parallel grid steps;
    single-TC chips (v5e/v6e) prefer grid=1."""
    try:
        kind = str(jax.devices()[0].device_kind).lower()
    except Exception:
        return 1
    if "v7" in kind or "7x" in kind or "v4" in kind:
        return 2
    return 1


def _pick_batch_tile(B, rows_per_b, num_tc, target_rows):
    """Batch elements per grid step (in packed-row units). Row blocks must be 8-sublane aligned
    unless one block spans the whole array."""
    cands = [bb for bb in range(1, B + 1)
             if B % bb == 0 and (bb == B or (bb * rows_per_b) % 8 == 0)]
    best = None
    for bb in sorted(cands):
        if bb * rows_per_b <= target_rows:
            best = bb
    if best is None:
        best = min(cands)
    if num_tc >= 2 and B // best < num_tc:
        splittable = [bb for bb in cands if B // bb >= num_tc]
        if splittable:
            best = max(splittable)
    return best


def _vmem_block_bytes(r, c, itemsize):
    rp = (max(r, 1) + 7) // 8 * 8
    cp = (max(c, 1) + 127) // 128 * 128
    return rp * cp * itemsize


def _block_diag(w, p):
    if p == 1:
        return w
    return jnp.kron(jnp.eye(p, dtype=w.dtype), w)


# ----------------------------------------------------------------------------
# Wrapper
# ----------------------------------------------------------------------------
def obser_conditional_ddpm_forward(x0, traj, ts, noise, params, schedule):
    B, T, D = x0.shape
    OBS = traj.shape[-1]
    H = params["w1"].shape[1]

    # Lane-dense packing factor: P logical rows per 128-lane physical row when it divides cleanly.
    P = 1
    if D < LANES and LANES % D == 0 and T % (LANES // D) == 0:
        P = LANES // D
    L = P * D                     # physical lane width of x-like arrays
    PH = P * H                    # physical lane width of the hidden activation
    R = (B * T) // P              # physical rows
    rows_per_b = T // P

    num_tc = _num_tensorcores_per_chip()
    target_rows = 1024 if num_tc >= 2 else 2048
    bb = _pick_batch_tile(B, rows_per_b, num_tc, target_rows)
    grid = B // bb
    rblk = bb * rows_per_b

    # --- glue (tiny XLA ops; the randomness itself is the caller's, as in the torch module) ---
    sac_rows = jnp.repeat(schedule["sqrt_alphas_cumprod"][ts], rows_per_b)            # (R,)
    somac_rows = jnp.repeat(schedule["sqrt_one_minus_alphas_cumprod"][ts], rows_per_b)
    coef = jnp.stack([sac_rows, somac_rows], axis=1)                                  # (R, 2)

    temb_b = params["temb_table"][ts] + params["b1"]                                  # (B, H)
    temb_rows = jnp.repeat(jnp.tile(temb_b, (1, P)), rows_per_b, axis=0)              # (R, P*H)

    # Contiguous, layout-preserving reshapes: (B,T,D) -> (R, P*D).
    x0_p = x0.reshape(R, L)
    noise_p = noise.reshape(R, L)
    traj_flat = traj.reshape(B * T, OBS)
    traj_p = jnp.pad(traj_flat, ((0, 0), (0, D - OBS))).reshape(R, L)                 # padded lanes never read

    w1_p = _block_diag(params["w1"], P).astype(jnp.bfloat16)                          # (P*D, P*H)
    w2_p = _block_diag(params["w2"], P).astype(jnp.bfloat16)                          # (P*H, P*D)
    b2_p = jnp.tile(params["b2"], (1, P))                                             # (1, P*D)

    f32b, bf16b = 4, 2
    cost = pl.CostEstimate(
        flops=4 * R * L * PH + 4 * R * PH + 3 * R * L,
        transcendentals=R * PH,
        bytes_accessed=(R * (3 * L + PH + 2) * f32b + R * L * f32b
                        + 2 * L * PH * bf16b + L * f32b),
    )

    # VMEM limit derived from actual per-step block footprint (double-buffered streams + weights).
    streamed = 2 * (_vmem_block_bytes(rblk, 2, f32b)
                    + 3 * _vmem_block_bytes(rblk, L, f32b)
                    + _vmem_block_bytes(rblk, PH, f32b)
                    + _vmem_block_bytes(rblk, L, f32b))
    const = 2 * (_vmem_block_bytes(L, PH, bf16b) + _vmem_block_bytes(PH, L, bf16b)
                 + _vmem_block_bytes(1, L, f32b))
    vmem_limit = int(min(100 * 1024 * 1024, max(16 * 1024 * 1024, streamed + const + (4 << 20))))

    kernel = functools.partial(ddpm_fwd_kernel, d_logical=D, obs=OBS)

    out_p = pl.pallas_call(
        kernel,
        out_shape=jax.ShapeDtypeStruct((R, L), x0.dtype),
        grid_spec=pltpu.PrefetchScalarGridSpec(
            num_scalar_prefetch=0,
            grid=(grid,),
            in_specs=[
                pl.BlockSpec((rblk, 2), lambda i: (i, 0)),     # [sqrt_ac, sqrt(1-ac)] per row
                pl.BlockSpec((rblk, L), lambda i: (i, 0)),     # x0 (packed)
                pl.BlockSpec((rblk, L), lambda i: (i, 0)),     # noise (packed)
                pl.BlockSpec((rblk, L), lambda i: (i, 0)),     # traj (padded + packed)
                pl.BlockSpec((rblk, PH), lambda i: (i, 0)),    # per-row time embedding (+ b1)
                pl.BlockSpec((L, PH), lambda i: (0, 0)),       # w1 (bf16, block-diag, grid-invariant)
                pl.BlockSpec((PH, L), lambda i: (0, 0)),       # w2 (bf16, block-diag, grid-invariant)
                pl.BlockSpec((1, L), lambda i: (0, 0)),        # b2 (tiled)
            ],
            out_specs=pl.BlockSpec((rblk, L), lambda i: (i, 0)),
        ),
        compiler_params=pltpu.CompilerParams(
            dimension_semantics=("parallel",),     # batch tiles are independent
            vmem_limit_bytes=vmem_limit,
        ),
        cost_estimate=cost,
    )(coef, x0_p, noise_p, traj_p, temb_rows, w1_p, w2_p, b2_p)

    target = noise    # pred_type == 'pred_noise'
    return target, out_p.reshape(B, T, D)


# ----------------------------------------------------------------------------
# Pure-JAX reference for correctness checking
# ----------------------------------------------------------------------------
def forward_ref(x0, traj, ts, noise, params, schedule):
    B, T, D = x0.shape
    sac = schedule["sqrt_alphas_cumprod"][ts].reshape(B, 1, 1)
    somac = schedule["sqrt_one_minus_alphas_cumprod"][ts].reshape(B, 1, 1)
    x_t = sac * x0 + somac * noise
    x_t = x_t.at[..., :OBS_DIM].set(traj)
    temb = params["temb_table"][ts][:, None, :]
    h = jnp.einsum("btd,dh->bth", x_t, params["w1"],
                   precision=lax.Precision.HIGHEST) + params["b1"] + temb
    h = h * jax.nn.sigmoid(h)
    out = jnp.einsum("bth,hd->btd", h, params["w2"],
                     precision=lax.Precision.HIGHEST) + params["b2"]
    return noise, out


if __name__ == "__main__":
    B, T, D, H = 4, 8, 32, 32

    key = jax.random.PRNGKey(0)
    k_x, k_traj, k_ts, k_noise, k_w1, k_w2, k_temb = jax.random.split(key, 7)

    # data['x'], data['traj']
    x0 = jax.random.normal(k_x, (B, T, D), jnp.float32)
    traj = jax.random.normal(k_traj, (B, T, OBS_DIM), jnp.float32)

    # rand_ts_noise (randomness is glue, as in the torch module)
    ts = jax.random.randint(k_ts, (B,), 0, TIMESTEPS)
    noise = jax.random.normal(k_noise, (B, T, D), jnp.float32)

    # deterministic synthetic eps_model parameters
    params = {
        "w1": 0.1 * jax.random.normal(k_w1, (D, H), jnp.float32),
        "b1": jnp.zeros((1, H), jnp.float32),
        "w2": 0.1 * jax.random.normal(k_w2, (H, D), jnp.float32),
        "b2": jnp.zeros((1, D), jnp.float32),
        "temb_table": 0.1 * jax.random.normal(k_temb, (TIMESTEPS, H), jnp.float32),
    }

    schedule = make_schedule_ddpm_linear(TIMESTEPS, 1e-4, 0.02)

    target, output = obser_conditional_ddpm_forward(x0, traj, ts, noise, params, schedule)
    jax.block_until_ready((target, output))

    t_ref, o_ref = forward_ref(x0, traj, ts, noise, params, schedule)
    np.testing.assert_allclose(np.asarray(target), np.asarray(t_ref), rtol=1e-6, atol=1e-6)
    # kernel uses bf16 MXU operands with f32 accumulation vs HIGHEST-precision f32 reference
    np.testing.assert_allclose(np.asarray(output), np.asarray(o_ref), rtol=2e-2, atol=2e-2)

    print("KERNEL_OK")
</pallas_src>

<mosaic_0001>
module attributes {stable_mosaic.version = 11 : i64} {
  func.func @ddpm_fwd_kernel(%arg0: i32, %arg1: memref<8x2xf32, #tpu.memory_space<vmem>>, %arg2: memref<8x128xf32, #tpu.memory_space<vmem>>, %arg3: memref<8x128xf32, #tpu.memory_space<vmem>>, %arg4: memref<8x128xf32, #tpu.memory_space<vmem>>, %arg5: memref<8x128xf32, #tpu.memory_space<vmem>>, %arg6: memref<128x128xbf16, #tpu.memory_space<vmem>>, %arg7: memref<128x128xbf16, #tpu.memory_space<vmem>>, %arg8: memref<1x128xf32, #tpu.memory_space<vmem>>, %arg9: memref<8x128xf32, #tpu.memory_space<vmem>>) attributes {dimension_semantics = [#tpu.dimension_semantics<parallel>], iteration_bounds = array<i64: 1>, scalar_prefetch = 0 : i64, scratch_operands = 0 : i64, tpu.core_type = #tpu.core_type<tc>, window_params = [{transform_indices = @transform_0, window_bounds = array<i64: 8, 2>}, {transform_indices = @transform_1, window_bounds = array<i64: 8, 128>}, {transform_indices = @transform_2, window_bounds = array<i64: 8, 128>}, {transform_indices = @transform_3, window_bounds = array<i64: 8, 128>}, {transform_indices = @transform_4, window_bounds = array<i64: 8, 128>}, {pipeline_mode = #tpu.pipeline_mode<synchronous>, transform_indices = @transform_5, window_bounds = array<i64: 128, 128>}, {pipeline_mode = #tpu.pipeline_mode<synchronous>, transform_indices = @transform_6, window_bounds = array<i64: 128, 128>}, {pipeline_mode = #tpu.pipeline_mode<synchronous>, transform_indices = @transform_7, window_bounds = array<i64: 1, 128>}, {transform_indices = @transform_8, window_bounds = array<i64: 8, 128>}]} {
    %c0 = arith.constant 0 : index
    %c0_0 = arith.constant 0 : index
    %0 = vector.load %arg1[%c0, %c0_0] : memref<8x2xf32, #tpu.memory_space<vmem>>, vector<8x2xf32>
    %1 = vector.extract_strided_slice %0 {offsets = [0, 0], sizes = [8, 1], strides = [1, 1]} : vector<8x2xf32> to vector<8x1xf32>
    %2 = vector.extract_strided_slice %0 {offsets = [0, 1], sizes = [8, 1], strides = [1, 1]} : vector<8x2xf32> to vector<8x1xf32>
    %c0_1 = arith.constant 0 : index
    %c0_2 = arith.constant 0 : index
    %3 = vector.load %arg2[%c0_1, %c0_2] : memref<8x128xf32, #tpu.memory_space<vmem>>, vector<8x128xf32>
    %4 = vector.broadcast %1 : vector<8x1xf32> to vector<8x128xf32>
    %5 = arith.mulf %4, %3 : vector<8x128xf32>
    %c0_3 = arith.constant 0 : index
    %c0_4 = arith.constant 0 : index
    %6 = vector.load %arg3[%c0_3, %c0_4] : memref<8x128xf32, #tpu.memory_space<vmem>>, vector<8x128xf32>
    %7 = vector.broadcast %2 : vector<8x1xf32> to vector<8x128xf32>
    %8 = arith.mulf %7, %6 : vector<8x128xf32>
    %9 = arith.addf %5, %8 : vector<8x128xf32>
    %10 = tpu.iota {dimensions = array<i32: 1>} : vector<1x128xi32>
    %c32_i32 = arith.constant 32 : i32
    %c0_i32 = arith.constant 0 : i32
    %11 = arith.cmpi eq, %c32_i32, %c0_i32 : i32
    %c1_i32 = arith.constant 1 : i32
    %12 = arith.select %11, %c1_i32, %c32_i32 : i32
    %13 = vector.broadcast %12 : i32 to vector<1x128xi32>
    %14 = arith.remsi %10, %13 : vector<1x128xi32>
    %c0_i32_5 = arith.constant 0 : i32
    %15 = vector.broadcast %c0_i32_5 : i32 to vector<1x128xi32>
    %16 = arith.cmpi ne, %14, %15 : vector<1x128xi32>
    %c0_i32_6 = arith.constant 0 : i32
    %17 = vector.broadcast %c0_i32_6 : i32 to vector<1x128xi32>
    %18 = arith.cmpi slt, %14, %17 : vector<1x128xi32>
    %c0_i32_7 = arith.constant 0 : i32
    %19 = arith.cmpi slt, %12, %c0_i32_7 : i32
    %20 = vector.broadcast %19 : i1 to vector<1x128xi1>
    %21 = vector.broadcast %20 : vector<1x128xi1> to vector<1x128xi1>
    %22 = arith.xori %18, %21 : vector<1x128xi1>
    %23 = arith.andi %22, %16 : vector<1x128xi1>
    %24 = vector.broadcast %12 : i32 to vector<1x128xi32>
    %25 = arith.addi %14, %24 : vector<1x128xi32>
    %26 = arith.select %23, %25, %14 : vector<1x128xi1>, vector<1x128xi32>
    %c9_i32 = arith.constant 9 : i32
    %27 = vector.broadcast %c9_i32 : i32 to vector<1x128xi32>
    %28 = arith.cmpi slt, %26, %27 : vector<1x128xi32>
    %c0_8 = arith.constant 0 : index
    %c0_9 = arith.constant 0 : index
    %29 = vector.load %arg4[%c0_8, %c0_9] : memref<8x128xf32, #tpu.memory_space<vmem>>, vector<8x128xf32>
    %30 = vector.shape_cast %28 : vector<1x128xi1> to vector<1x128xi1>
    %31 = vector.broadcast %30 : vector<1x128xi1> to vector<8x128xi1>
    %32 = arith.select %31, %29, %9 : vector<8x128xi1>, vector<8x128xf32>
    %33 = arith.truncf %32 : vector<8x128xf32> to vector<8x128xbf16>
    %c0_10 = arith.constant 0 : index
    %c0_11 = arith.constant 0 : index
    %34 = vector.load %arg6[%c0_10, %c0_11] : memref<128x128xbf16, #tpu.memory_space<vmem>>, vector<128x128xbf16>
    %cst = arith.constant dense<0.000000e+00> : vector<8x128xf32>
    %35 = tpu.matmul %33, %34, %cst {dimension_numbers = #tpu.dot_dimension_numbers<[1], [0], [0], [1], [0, 0, 1, 1], [], []>} : vector<8x128xbf16>, vector<128x128xbf16>, vector<8x128xf32> -> vector<8x128xf32>
    %c0_12 = arith.constant 0 : index
    %c0_13 = arith.constant 0 : index
    %36 = vector.load %arg5[%c0_12, %c0_13] : memref<8x128xf32, #tpu.memory_space<vmem>>, vector<8x128xf32>
    %37 = arith.addf %35, %36 : vector<8x128xf32>
    %38 = arith.negf %37 : vector<8x128xf32>
    %39 = math.exp %38 : vector<8x128xf32>
    %cst_14 = arith.constant 1.000000e+00 : f32
    %40 = vector.broadcast %cst_14 : f32 to vector<8x128xf32>
    %41 = arith.addf %40, %39 : vector<8x128xf32>
    %42 = arith.divf %40, %41 : vector<8x128xf32>
    %43 = arith.mulf %37, %42 : vector<8x128xf32>
    %44 = arith.truncf %43 : vector<8x128xf32> to vector<8x128xbf16>
    %c0_15 = arith.constant 0 : index
    %c0_16 = arith.constant 0 : index
    %45 = vector.load %arg7[%c0_15, %c0_16] : memref<128x128xbf16, #tpu.memory_space<vmem>>, vector<128x128xbf16>
    %cst_17 = arith.constant dense<0.000000e+00> : vector<8x128xf32>
    %46 = tpu.matmul %44, %45, %cst_17 {dimension_numbers = #tpu.dot_dimension_numbers<[1], [0], [0], [1], [0, 0, 1, 1], [], []>} : vector<8x128xbf16>, vector<128x128xbf16>, vector<8x128xf32> -> vector<8x128xf32>
    %c0_18 = arith.constant 0 : index
    %c0_19 = arith.constant 0 : index
    %47 = vector.load %arg8[%c0_18, %c0_19] : memref<1x128xf32, #tpu.memory_space<vmem>>, vector<1x128xf32>
    %48 = vector.broadcast %47 : vector<1x128xf32> to vector<8x128xf32>
    %49 = arith.addf %46, %48 : vector<8x128xf32>
    %c0_20 = arith.constant 0 : index
    %c0_21 = arith.constant 0 : index
    %50 = vector.load %arg9[%c0_20, %c0_21] : memref<8x128xf32, #tpu.memory_space<vmem>>, vector<8x128xf32>
    tpu.vector_store %arg9[%c0_20, %c0_21], %49 {strides = array<i32>} : memref<8x128xf32, #tpu.memory_space<vmem>>, vector<8x128xf32>,
    return
  }
  func.func @transform_0(%arg0: i32) -> (i32, i32) {
    %c0_i32 = arith.constant 0 : i32
    %c0_i32_0 = arith.constant 0 : i32
    return %arg0, %c0_i32 : i32, i32
  }
  func.func @transform_1(%arg0: i32) -> (i32, i32) {
    %c0_i32 = arith.constant 0 : i32
    %c0_i32_0 = arith.constant 0 : i32
    return %arg0, %c0_i32 : i32, i32
  }
  func.func @transform_2(%arg0: i32) -> (i32, i32) {
    %c0_i32 = arith.constant 0 : i32
    %c0_i32_0 = arith.constant 0 : i32
    return %arg0, %c0_i32 : i32, i32
  }
  func.func @transform_3(%arg0: i32) -> (i32, i32) {
    %c0_i32 = arith.constant 0 : i32
    %c0_i32_0 = arith.constant 0 : i32
    return %arg0, %c0_i32 : i32, i32
  }
  func.func @transform_4(%arg0: i32) -> (i32, i32) {
    %c0_i32 = arith.constant 0 : i32
    %c0_i32_0 = arith.constant 0 : i32
    return %arg0, %c0_i32 : i32, i32
  }
  func.func @transform_5(%arg0: i32) -> (i32, i32) {
    %c0_i32 = arith.constant 0 : i32
    %c0_i32_0 = arith.constant 0 : i32
    %c0_i32_1 = arith.constant 0 : i32
    return %c0_i32, %c0_i32_0 : i32, i32
  }
  func.func @transform_6(%arg0: i32) -> (i32, i32) {
    %c0_i32 = arith.constant 0 : i32
    %c0_i32_0 = arith.constant 0 : i32
    %c0_i32_1 = arith.constant 0 : i32
    return %c0_i32, %c0_i32_0 : i32, i32
  }
  func.func @transform_7(%arg0: i32) -> (i32, i32) {
    %c0_i32 = arith.constant 0 : i32
    %c0_i32_0 = arith.constant 0 : i32
    %c0_i32_1 = arith.constant 0 : i32
    return %c0_i32, %c0_i32_0 : i32, i32
  }
  func.func @transform_8(%arg0: i32) -> (i32, i32) {
    %c0_i32 = arith.constant 0 : i32
    %c0_i32_0 = arith.constant 0 : i32
    return %arg0, %c0_i32 : i32, i32
  }
}

</mosaic_0001>

<llo_original>
// kernel: tpu_custom_call.1
$region0: #{tpu_custom_call.1}
  #allocation0 [shape = 'u32[]', space=smem, size = 0x4, offset = 0x4, fixed_abs, tag = 'smem constant byte address 0x4 - core index']
  #allocation1 [shape = 'u32[72,128]{1,0:T(1,128)}', space=vmem, size = 0x9000, scoped, tag = 'internal scratch']
  %s0 = inlined_call_operand.vmem [shape: f32[8,2], index: 0, kind: input, shape index: {}]
  %s1 = inlined_call_operand.vmem [shape: f32[8,128], index: 1, kind: input, shape index: {}]
  %s2 = inlined_call_operand.hbm [shape: f32[8,128], index: 2, kind: input, shape index: {}]
  %s3 = inlined_call_operand.hbm [shape: f32[8,128], index: 3, kind: input, shape index: {}]
  %s4 = inlined_call_operand.hbm [shape: f32[8,128], index: 4, kind: input, shape index: {}]
  %s5 = inlined_call_operand.hbm [shape: bf16[128,128], index: 5, kind: input, shape index: {}]
  %s6 = inlined_call_operand.hbm [shape: bf16[128,128], index: 6, kind: input, shape index: {}]
  %s7 = inlined_call_operand.vmem [shape: f32[1,128], index: 7, kind: input, shape index: {}]
  %s8 = inlined_call_operand.hbm [shape: f32[8,128], index: 8, kind: output, shape index: {}]
  %s9 = sld [smem:[#allocation0]]
  $region62: #{tpu_custom_call.1} parent=0
    _
  %s11 = ssub.s32 1, %s9
  %s12 = scalar_select 0, %s11, %s9
  $region1: #{tpu_custom_call.1} parent=0
    #allocation2 [shape = 'u8[4096]{0}', space=vmem, size = 0x1000, scoped, tag = 'input window, operand 2, single buffered']
    #allocation3 [shape = 's32[1]{0}', space=sflag, size = 0x4, scoped, tag = 'scoped memory for tpu_custom_call.1']
    #allocation4 [shape = 's32[1]{0}', space=sflag, size = 0x4, scoped, tag = 'scoped memory for tpu_custom_call.1']
    #allocation5 [shape = 'u8[4096]{0}', space=vmem, size = 0x1000, scoped, tag = 'input window, operand 3, single buffered']
    #allocation6 [shape = 's32[1]{0}', space=sflag, size = 0x4, scoped, tag = 'scoped memory for tpu_custom_call.1']
    #allocation7 [shape = 'u8[4096]{0}', space=vmem, size = 0x1000, scoped, tag = 'input window, operand 4, single buffered']
    #allocation8 [shape = 'u8[32768]{0}', space=vmem, size = 0x8000, scoped, tag = 'input window, operand 5, single buffered']
    #allocation9 [shape = 's32[1]{0}', space=sflag, size = 0x4, scoped, tag = 'scoped memory for tpu_custom_call.1']
    #allocation10 [shape = 'u8[32768]{0}', space=vmem, size = 0x8000, scoped, tag = 'input window, operand 6, single buffered']
    #allocation11 [shape = 'u8[4096]{0}', space=vmem, size = 0x1000, scoped, tag = 'output window, operand 0, single buffered']
    %13 = vsyncpa [#allocation3], 0
    %14 = vsyncpa [#allocation6], 0
    %15 = vsyncpa [#allocation9], 0
    %16 = vsyncpa [#allocation4], 0
    // Predicated region
    $region2: #{tpu_custom_call.1} parent=1 // pred_check
      _
    $region3: #{tpu_custom_call.1} parent=1 // pred_check_branch
      %18 = sbr.rel (0) target = $region5
    $region4: #{tpu_custom_call.1} parent=1 // pred_region
      _
    $region5: #{tpu_custom_call.1} parent=1 // pred_fallthru
      _
    // Predicated region
    $region6: #{tpu_custom_call.1} parent=1 // pred_check
      _
    $region7: #{tpu_custom_call.1} parent=1 // pred_check_branch
      %20 = sbr.rel (0) target = $region9
    $region8: #{tpu_custom_call.1} parent=1 // pred_region
      _
    $region9: #{tpu_custom_call.1} parent=1 // pred_fallthru
      _
    // Predicated region
    $region10: #{tpu_custom_call.1} parent=1 // pred_check
      _
    $region11: #{tpu_custom_call.1} parent=1 // pred_check_branch
      %22 = sbr.rel (0) target = $region13
    $region12: #{tpu_custom_call.1} parent=1 // pred_region
      %24 = vsyncadd [#allocation3], 0
      %s26 = sshll.u32 %s2, 4
      %s27 = int_to_ptr.hbm [resolvable:$true] %s26
      %s28 = sshll.u32 [#allocation2], 4
      %s29 = int_to_ptr.vmem [resolvable:$true] %s28
      %31 = dma.hbm_to_vmem [thread:$0]  %s27, 128, %s29, [#allocation3]
    $region13: #{tpu_custom_call.1} parent=1 // pred_fallthru
      _
    // Predicated region
    $region14: #{tpu_custom_call.1} parent=1 // pred_check
      _
    $region15: #{tpu_custom_call.1} parent=1 // pred_check_branch
      %33 = sbr.rel (0) target = $region17
    $region16: #{tpu_custom_call.1} parent=1 // pred_region
      %35 = vsyncadd [#allocation6], 0
      %s37 = sshll.u32 %s3, 4
      %s38 = int_to_ptr.hbm [resolvable:$true] %s37
      %s39 = sshll.u32 [#allocation5], 4
      %s40 = int_to_ptr.vmem [resolvable:$true] %s39
      %42 = dma.hbm_to_vmem [thread:$0]  %s38, 128, %s40, [#allocation6]
    $region17: #{tpu_custom_call.1} parent=1 // pred_fallthru
      _
    // Predicated region
    $region18: #{tpu_custom_call.1} parent=1 // pred_check
      _
    $region19: #{tpu_custom_call.1} parent=1 // pred_check_branch
      %44 = sbr.rel (0) target = $region21
    $region20: #{tpu_custom_call.1} parent=1 // pred_region
      %46 = vsyncadd [#allocation6], 0
      %s48 = sshll.u32 %s4, 4
      %s49 = int_to_ptr.hbm [resolvable:$true] %s48
      %s50 = sshll.u32 [#allocation7], 4
      %s51 = int_to_ptr.vmem [resolvable:$true] %s50
      %53 = dma.hbm_to_vmem [thread:$0]  %s49, 128, %s51, [#allocation6]
    $region21: #{tpu_custom_call.1} parent=1 // pred_fallthru
      _
    // Predicated region
    $region22: #{tpu_custom_call.1} parent=1 // pred_check
      _
    $region23: #{tpu_custom_call.1} parent=1 // pred_check_branch
      %55 = sbr.rel (0) target = $region25
    $region24: #{tpu_custom_call.1} parent=1 // pred_region
      %57 = vsyncadd [#allocation9], 0
      %s58 = sshll.u32 %s5, 4
      %s59 = int_to_ptr.hbm [resolvable:$true] %s58
      %s60 = sshll.u32 [#allocation8], 4
      %s61 = int_to_ptr.vmem [resolvable:$true] %s60
      %66 = dma.hbm_to_vmem [thread:$0]  %s59, 1024, %s61, [#allocation9], 64, 64, 4
    $region25: #{tpu_custom_call.1} parent=1 // pred_fallthru
      _
    // Predicated region
    $region26: #{tpu_custom_call.1} parent=1 // pred_check
      _
    $region27: #{tpu_custom_call.1} parent=1 // pred_check_branch
      %68 = sbr.rel (0) target = $region29
    $region28: #{tpu_custom_call.1} parent=1 // pred_region
      %70 = vsyncadd [#allocation9], 0
      %s71 = sshll.u32 %s6, 4
      %s72 = int_to_ptr.hbm [resolvable:$true] %s71
      %s73 = sshll.u32 [#allocation10], 4
      %s74 = int_to_ptr.vmem [resolvable:$true] %s73
      %79 = dma.hbm_to_vmem [thread:$0]  %s72, 1024, %s74, [#allocation9], 64, 64, 4
    $region29: #{tpu_custom_call.1} parent=1 // pred_fallthru
      _
    // Predicated region
    $region30: #{tpu_custom_call.1} parent=1 // pred_check
      _
    $region31: #{tpu_custom_call.1} parent=1 // pred_check_branch
      %81 = sbr.rel (0) target = $region33
    $region32: #{tpu_custom_call.1} parent=1 // pred_region
      _
    $region33: #{tpu_custom_call.1} parent=1 // pred_fallthru
      _
    // Predicated region
    $region34: #{tpu_custom_call.1} parent=1 // pred_check
      _
    $region35: #{tpu_custom_call.1} parent=1 // pred_check_branch
      %83 = sbr.rel (0) target = $region37
    $region36: #{tpu_custom_call.1} parent=1 // pred_region
      %85 = dma.done [#allocation3], 128
    $region37: #{tpu_custom_call.1} parent=1 // pred_fallthru
      _
    // Predicated region
    $region38: #{tpu_custom_call.1} parent=1 // pred_check
      _
    $region39: #{tpu_custom_call.1} parent=1 // pred_check_branch
      %87 = sbr.rel (0) target = $region41
    $region40: #{tpu_custom_call.1} parent=1 // pred_region
      %89 = dma.done [#allocation6], 128
    $region41: #{tpu_custom_call.1} parent=1 // pred_fallthru
      _
    // Predicated region
    $region42: #{tpu_custom_call.1} parent=1 // pred_check
      _
    $region43: #{tpu_custom_call.1} parent=1 // pred_check_branch
      %91 = sbr.rel (0) target = $region45
    $region44: #{tpu_custom_call.1} parent=1 // pred_region
      %93 = dma.done [#allocation6], 128
    $region45: #{tpu_custom_call.1} parent=1 // pred_fallthru
      _
    // Predicated region
    $region46: #{tpu_custom_call.1} parent=1 // pred_check
      _
    $region47: #{tpu_custom_call.1} parent=1 // pred_check_branch
      %95 = sbr.rel (0) target = $region49
    $region48: #{tpu_custom_call.1} parent=1 // pred_region
      %97 = dma.done [#allocation9], 1024
    $region49: #{tpu_custom_call.1} parent=1 // pred_fallthru
      _
    // Predicated region
    $region50: #{tpu_custom_call.1} parent=1 // pred_check
      _
    $region51: #{tpu_custom_call.1} parent=1 // pred_check_branch
      %99 = sbr.rel (0) target = $region53
    $region52: #{tpu_custom_call.1} parent=1 // pred_region
      %101 = dma.done [#allocation9], 1024
    $region53: #{tpu_custom_call.1} parent=1 // pred_fallthru
      _
    %v102 = vld [vmem:[%s0] sm:$0xff]
    %v103 = vld [vmem:[%s1] sm:$0xff]
    %105 = vset.pattern.permute.xlu0 0
    %106 = vperm.xlu0 %105, %v102
    %v107 = vpop.permute.xlu0 %106
    %v109 = vmul.f32 %v107, %v103
    %v110 = vld [vmem:[#allocation2] sm:$0xff]
    %111 = vset.pattern.permute.xlu0 1
    %112 = vperm.xlu0 %111, %v102
    %v113 = vpop.permute.xlu0 %112
    %v115 = vmul.f32 %v113, %v110
    %v116 = vadd.f32 %v109, %v115
    %v117 = vlaneseq
    %v118 = vand.u32 %v117, 127
    %vm119 = vcmp.lt.s32.totalorder %v118, 0
    %v120 = vsub.s32 0, %v118
    %v121 = vsel %vm119, %v120, %v118
    %v122 = vshrl.u32 %v121, 5
    %v123 = vand.u32 %v121, 31
    %v124 = vsub.s32 0, %v123
    %v125 = vsel %vm119, %v124, %v123
    %vm126 = vcmp.ne.s32.totalorder %v125, 0
    %vm127 = vcmp.lt.s32.totalorder %v125, 0
    %vm128 = vmand %vm127, %vm126
    %v129 = vadd.s32 %v125, 32
    %v130 = vsel %vm128, %v129, %v125
    %vm131 = vcmp.lt.s32.totalorder %v130, 9
    %v132 = vld [vmem:[#allocation5] sm:$0xff]
    %v133 = vsel %vm131, 1, 0
    %vm134 = vcmp.eq.s32.totalorder %v133, 1
    %v135 = vsel %vm134, %v132, %v116
    %v136 = vpack.c.bf16 %v135, %v135
    %v137 = vld [vmem:[#allocation8] sm:$0xf]
    %v138 = vld [vmem:[#allocation8 + $0x4] sm:$0xf]
    %v139 = vld [vmem:[#allocation8 + $0x8] sm:$0xf]
    %v140 = vld [vmem:[#allocation8 + $0xc] sm:$0xf]
    %v141 = vld [vmem:[#allocation8 + $0x10] sm:$0xf]
    %v142 = vld [vmem:[#allocation8 + $0x14] sm:$0xf]
    %v143 = vld [vmem:[#allocation8 + $0x18] sm:$0xf]
    %v144 = vld [vmem:[#allocation8 + $0x1c] sm:$0xf]
    %v145 = vld [vmem:[#allocation8 + $0x20] sm:$0xf]
    %v146 = vld [vmem:[#allocation8 + $0x24] sm:$0xf]
    %v147 = vld [vmem:[#allocation8 + $0x28] sm:$0xf]
    %v148 = vld [vmem:[#allocation8 + $0x2c] sm:$0xf]
    %v149 = vld [vmem:[#allocation8 + $0x30] sm:$0xf]
    %v150 = vld [vmem:[#allocation8 + $0x34] sm:$0xf]
    %v151 = vld [vmem:[#allocation8 + $0x38] sm:$0xf]
    %v152 = vld [vmem:[#allocation8 + $0x3c] sm:$0xf]
    %v153 = vld [vmem:[#allocation7] sm:$0xff]
    %v170 = vunpack.c.l.b16 %v137
    %v171 = vunpack.c.l.b16 %v138
    %v172 = vunpack.c.l.b16 %v139
    %v173 = vunpack.c.l.b16 %v140
    %v174 = vunpack.c.l.b16 %v141
    %v175 = vunpack.c.l.b16 %v142
    %v176 = vunpack.c.l.b16 %v143
    %v177 = vunpack.c.l.b16 %v144
    %v178 = vunpack.c.l.b16 %v145
    %v179 = vunpack.c.l.b16 %v146
    %v180 = vunpack.c.l.b16 %v147
    %v181 = vunpack.c.l.b16 %v148
    %v182 = vunpack.c.l.b16 %v149
    %v183 = vunpack.c.l.b16 %v150
    %v184 = vunpack.c.l.b16 %v151
    %v185 = vunpack.c.l.b16 %v152
    %v186 = vpack.c.b16 %v171, %v170
    %v187 = vpack.c.b16 %v173, %v172
    %v188 = vpack.c.b16 %v175, %v174
    %v189 = vpack.c.b16 %v177, %v176
    %v190 = vpack.c.b16 %v179, %v178
    %v191 = vpack.c.b16 %v181, %v180
    %v192 = vpack.c.b16 %v183, %v182
    %v193 = vpack.c.b16 %v185, %v184
    %202 = vmatpush.bf16.msra.mxu0 %v193
    %203 = vmatpush.bf16.msra.mxu0 %v192
    %204 = vmatpush.bf16.msra.mxu0 %v191
    %205 = vmatpush.bf16.msra.mxu0 %v190
    %206 = vmatpush.bf16.msra.mxu0 %v189
    %207 = vmatpush.bf16.msra.mxu0 %v188
    %208 = vmatpush.bf16.msra.mxu0 %v187
    %209 = vmatpush.bf16.msra.mxu0 %v186
    %210 = vmatmul.bf16.gmra.mxu0 %v136
    %v211 = vpop.f32.mrf.mxu0
    %v212 = vadd.f32 %v153, %v211
    %v213 = vpop.f32.mrf.mxu0
    %214 = vdwg.mxu0
    %v215 = vxor.u32 %v212, 2147483648
    %v216 = vmul.f32 %v215, 1.442695
    %v217 = vpow.pop %v216
    %v218 = vadd.f32 %v217, 1.0
    %v219 = vrcp.pop %v218
    %v220 = vmul.f32 %v218, %v219
    %v221 = vsub.f32 1.0, %v220
    %v222 = vmul.f32 %v219, %v221
    %v223 = vadd.f32 %v219, %v222
    %vm224 = vweird.f32 %v218
    %vm225 = vweird.f32 %v219
    %vm226 = vmor %vm224, %vm225
    %v227 = vsel %vm226, %v219, %v223
    %v228 = vand.u32 2147483647, %v218
    %vm229 = vcmp.eq.f32.partialorder %v228, 8.507059e+37
    %v230 = vand.u32 %v218, 2147483648
    %v231 = vor.u32 1.1754944e-38, %v230
    %v232 = vsel %vm229, %v231, %v227
    %v233 = vmul.f32 1.0, %v232
    %v234 = vmul.f32 %v212, %v233
    %v235 = vpack.c.bf16 %v234, %v234
    %v236 = vld [vmem:[#allocation10] sm:$0xf]
    %v237 = vld [vmem:[#allocation10 + $0x4] sm:$0xf]
    %v238 = vld [vmem:[#allocation10 + $0x8] sm:$0xf]
    %v239 = vld [vmem:[#allocation10 + $0xc] sm:$0xf]
    %v240 = vld [vmem:[#allocation10 + $0x10] sm:$0xf]
    %v241 = vld [vmem:[#allocation10 + $0x14] sm:$0xf]
    %v242 = vld [vmem:[#allocation10 + $0x18] sm:$0xf]
    %v243 = vld [vmem:[#allocation10 + $0x1c] sm:$0xf]
    %v244 = vld [vmem:[#allocation10 + $0x20] sm:$0xf]
    %v245 = vld [vmem:[#allocation10 + $0x24] sm:$0xf]
    %v246 = vld [vmem:[#allocation10 + $0x28] sm:$0xf]
    %v247 = vld [vmem:[#allocation10 + $0x2c] sm:$0xf]
    %v248 = vld [vmem:[#allocation10 + $0x30] sm:$0xf]
    %v249 = vld [vmem:[#allocation10 + $0x34] sm:$0xf]
    %v250 = vld [vmem:[#allocation10 + $0x38] sm:$0xf]
    %v251 = vld [vmem:[#allocation10 + $0x3c] sm:$0xf]
    %v252 = vld [vmem:[%s7] sm:$0x1]
    %v254 = vperm.slane %v252, 0
    %v272 = vunpack.c.l.b16 %v236
    %v273 = vunpack.c.l.b16 %v237
    %v274 = vunpack.c.l.b16 %v238
    %v275 = vunpack.c.l.b16 %v239
    %v276 = vunpack.c.l.b16 %v240
    %v277 = vunpack.c.l.b16 %v241
    %v278 = vunpack.c.l.b16 %v242
    %v279 = vunpack.c.l.b16 %v243
    %v280 = vunpack.c.l.b16 %v244
    %v281 = vunpack.c.l.b16 %v245
    %v282 = vunpack.c.l.b16 %v246
    %v283 = vunpack.c.l.b16 %v247
    %v284 = vunpack.c.l.b16 %v248
    %v285 = vunpack.c.l.b16 %v249
    %v286 = vunpack.c.l.b16 %v250
    %v287 = vunpack.c.l.b16 %v251
    %v288 = vpack.c.b16 %v273, %v272
    %v289 = vpack.c.b16 %v275, %v274
    %v290 = vpack.c.b16 %v277, %v276
    %v291 = vpack.c.b16 %v279, %v278
    %v292 = vpack.c.b16 %v281, %v280
    %v293 = vpack.c.b16 %v283, %v282
    %v294 = vpack.c.b16 %v285, %v284
    %v295 = vpack.c.b16 %v287, %v286
    %304 = vmatpush.bf16.msra.mxu0 %v295
    %305 = vmatpush.bf16.msra.mxu0 %v294
    %306 = vmatpush.bf16.msra.mxu0 %v293
    %307 = vmatpush.bf16.msra.mxu0 %v292
    %308 = vmatpush.bf16.msra.mxu0 %v291
    %309 = vmatpush.bf16.msra.mxu0 %v290
    %310 = vmatpush.bf16.msra.mxu0 %v289
    %311 = vmatpush.bf16.msra.mxu0 %v288
    %312 = vmatmul.bf16.gmra.mxu0 %v235
    %v313 = vpop.f32.mrf.mxu0
    %v314 = vadd.f32 %v254, %v313
    %v315 = vpop.f32.mrf.mxu0
    %316 = vdwg.mxu0
    %317 = vst [vmem:[#allocation11] sm:$0xff] %v314
    // Predicated region
    $region54: #{tpu_custom_call.1} parent=1 // pred_check
      _
    $region55: #{tpu_custom_call.1} parent=1 // pred_check_branch
      %319 = sbr.rel (0) target = $region57
    $region56: #{tpu_custom_call.1} parent=1 // pred_region
      %321 = vsyncadd [#allocation4], 0
      %s323 = sshll.u32 [#allocation11], 4
      %s324 = int_to_ptr.vmem [resolvable:$true] %s323
      %s325 = sshll.u32 %s8, 4
      %s326 = int_to_ptr.hbm [resolvable:$true] %s325
      %328 = dma.vmem_to_hbm [thread:$0]  %s324, 128, %s326, [#allocation4]
    $region57: #{tpu_custom_call.1} parent=1 // pred_fallthru
      _
    // Predicated region
    $region58: #{tpu_custom_call.1} parent=1 // pred_check
      _
    $region59: #{tpu_custom_call.1} parent=1 // pred_check_branch
      %330 = sbr.rel (0) target = $region61
    $region60: #{tpu_custom_call.1} parent=1 // pred_region
      %332 = dma.done [#allocation4], 128
    $region61: #{tpu_custom_call.1} parent=1 // pred_fallthru
      _
    %333 = vsyncpa [#allocation3], 1
    %334 = vsyncpa [#allocation6], 1
    %335 = vsyncpa [#allocation9], 1
    %336 = vsyncpa [#allocation4], 1

</llo_original>
